<compile_context>
chip_gen: v7x
topology: tpu7x:2x2x1
jax: 0.10.0
libtpu: 0.0.40
codegen_flags: <defaults>
</compile_context>

<pallas_src>
import jax
import jax.numpy as jnp
from jax.experimental import pallas as pl
from jax.experimental.pallas import tpu as pltpu


def _linear_bias_kernel(x_ref, wt_ref, b_ref, o_ref):
    """One (tm, tn) output tile: full-K MXU matmul, bias folded into the store."""
    o_ref[...] = (
        jnp.dot(x_ref[...], wt_ref[...], preferred_element_type=jnp.float32)
        + b_ref[...]
    ).astype(o_ref.dtype)


def _sublane_multiple(dtype):
    # f32 -> 8, bf16 -> 16, int8/fp8 -> 32 rows per vreg sublane group.
    return {4: 8, 2: 16, 1: 32}.get(jnp.dtype(dtype).itemsize, 8)


def _pick_tiles(B, K, N, x_dtype, out_dtype):
    """Shape-derived tile sizes that keep the MXU fed and fit scoped VMEM."""
    sub = _sublane_multiple(x_dtype)
    in_bytes = jnp.dtype(x_dtype).itemsize
    out_bytes = jnp.dtype(out_dtype).itemsize

    # Batch tile: full batch when small (block == full dim is always legal),
    # otherwise a sublane-aligned 256-row tile (cdiv masks the ragged edge).
    tm = B if B <= 256 else 256

    # Output-feature tile: lane-dense and as wide as practical. N itself when
    # <= 512 (full dim is always legal), otherwise 512 (multiple of 128).
    tn = N if N <= 512 else 512

    # Keep the double-buffered working set comfortably inside scoped VMEM
    # (budgeted for v7x's 64 MiB physical; v5e/v6e have plenty more).
    def working_set(tm_, tn_):
        return (2 * (tm_ * K + K * tn_ + tn_) * in_bytes
                + 2 * tm_ * tn_ * out_bytes)

    budget = 20 * 1024 * 1024
    while working_set(tm, tn) > budget and tn > 128 and tn % 256 == 0:
        tn //= 2
    while working_set(tm, tn) > budget and tm > 2 * sub and tm % (2 * sub) == 0:
        tm //= 2
    # TODO(synk): if K itself ever exceeds the VMEM budget (not possible for
    # Encoder's conv_dim*16 features), reintroduce a K reduction axis.
    return tm, tn


@jax.jit
def encoder_forward(x, wt, bias):
    """y = x @ wt + bias  (nn.Linear with the weight pre-transposed).

    x:    (B, in_features)
    wt:   (in_features, out_features)  -- PyTorch weight.T, done at load time
    bias: (out_features,)
    """
    B, K = x.shape
    K2, N = wt.shape
    assert K == K2, "in_features mismatch"

    tm, tn = _pick_tiles(B, K, N, x.dtype, x.dtype)

    # Bias kept in f32 so it adds directly onto the f32 MXU accumulator.
    b2 = bias.reshape(1, N).astype(jnp.float32)

    grid = (pl.cdiv(B, tm), pl.cdiv(N, tn))

    return pl.pallas_call(
        _linear_bias_kernel,
        out_shape=jax.ShapeDtypeStruct((B, N), x.dtype),
        grid_spec=pltpu.PrefetchScalarGridSpec(
            num_scalar_prefetch=0,
            grid=grid,
            in_specs=[
                pl.BlockSpec((tm, K), lambda i, j: (i, 0)),   # x tile (full K)
                pl.BlockSpec((K, tn), lambda i, j: (0, j)),   # W^T tile (full K)
                pl.BlockSpec((1, tn), lambda i, j: (0, j)),   # bias tile
            ],
            out_specs=pl.BlockSpec((tm, tn), lambda i, j: (i, j)),
        ),
        compiler_params=pltpu.CompilerParams(
            dimension_semantics=("parallel", "parallel"),
            vmem_limit_bytes=48 * 1024 * 1024,
        ),
    )(x, wt, b2)


if __name__ == "__main__":
    # Small shapes consistent with the module: conv_dim=8 -> features = 8*16 = 128
    conv_dim = 8
    feat = conv_dim * 16          # 128
    batch = 8

    key = jax.random.PRNGKey(0)
    kx, kw, kb = jax.random.split(key, 3)

    # Deterministic synthetic parameters (PyTorch-Linear-like uniform init scale)
    bound = 1.0 / jnp.sqrt(feat)
    weight = jax.random.uniform(kw, (feat, feat), jnp.float32, -bound, bound)  # (out, in)
    bias = jax.random.uniform(kb, (feat,), jnp.float32, -bound, bound)
    x = jax.random.normal(kx, (batch, feat), jnp.float32)

    # Parameter-load-time transpose (hoisted out of the per-call path):
    # the weight is stored as (in_features, out_features) once.
    wt = jnp.asarray(weight.T)

    y = encoder_forward(x, wt, bias)
    y = jax.block_until_ready(y)

    # Reference check (plain JAX) to ensure semantics match nn.Linear
    y_ref = x @ weight.T + bias
    assert y.shape == (batch, feat)
    assert jnp.allclose(y, y_ref, atol=1e-4, rtol=1e-4)

    print("KERNEL_OK")
</pallas_src>

<mosaic_0001>
module attributes {stable_mosaic.version = 11 : i64} {
  func.func @_linear_bias_kernel(%arg0: i32, %arg1: i32, %arg2: memref<8x128xf32, #tpu.memory_space<vmem>>, %arg3: memref<128x128xf32, #tpu.memory_space<vmem>>, %arg4: memref<1x128xf32, #tpu.memory_space<vmem>>, %arg5: memref<8x128xf32, #tpu.memory_space<vmem>>) attributes {dimension_semantics = [#tpu.dimension_semantics<parallel>, #tpu.dimension_semantics<parallel>], iteration_bounds = array<i64: 1, 1>, scalar_prefetch = 0 : i64, scratch_operands = 0 : i64, tpu.core_type = #tpu.core_type<tc>, window_params = [{transform_indices = @transform_0, window_bounds = array<i64: 8, 128>}, {transform_indices = @transform_1, window_bounds = array<i64: 128, 128>}, {transform_indices = @transform_2, window_bounds = array<i64: 1, 128>}, {transform_indices = @transform_3, window_bounds = array<i64: 8, 128>}]} {
    %c0 = arith.constant 0 : index
    %c0_0 = arith.constant 0 : index
    %0 = vector.load %arg2[%c0, %c0_0] : memref<8x128xf32, #tpu.memory_space<vmem>>, vector<8x128xf32>
    %c0_1 = arith.constant 0 : index
    %c0_2 = arith.constant 0 : index
    %1 = vector.load %arg3[%c0_1, %c0_2] : memref<128x128xf32, #tpu.memory_space<vmem>>, vector<128x128xf32>
    %cst = arith.constant dense<0.000000e+00> : vector<8x128xf32>
    %2 = tpu.matmul %0, %1, %cst {dimension_numbers = #tpu.dot_dimension_numbers<[1], [0], [0], [1], [0, 0, 1, 1], [], []>} : vector<8x128xf32>, vector<128x128xf32>, vector<8x128xf32> -> vector<8x128xf32>
    %c0_3 = arith.constant 0 : index
    %c0_4 = arith.constant 0 : index
    %3 = vector.load %arg4[%c0_3, %c0_4] : memref<1x128xf32, #tpu.memory_space<vmem>>, vector<1x128xf32>
    %4 = vector.broadcast %3 : vector<1x128xf32> to vector<8x128xf32>
    %5 = arith.addf %2, %4 : vector<8x128xf32>
    %c0_5 = arith.constant 0 : index
    %c0_6 = arith.constant 0 : index
    %6 = vector.load %arg5[%c0_5, %c0_6] : memref<8x128xf32, #tpu.memory_space<vmem>>, vector<8x128xf32>
    tpu.vector_store %arg5[%c0_5, %c0_6], %5 {strides = array<i32>} : memref<8x128xf32, #tpu.memory_space<vmem>>, vector<8x128xf32>,
    return
  }
  func.func @transform_0(%arg0: i32, %arg1: i32) -> (i32, i32) {
    %c0_i32 = arith.constant 0 : i32
    %c0_i32_0 = arith.constant 0 : i32
    return %arg0, %c0_i32 : i32, i32
  }
  func.func @transform_1(%arg0: i32, %arg1: i32) -> (i32, i32) {
    %c0_i32 = arith.constant 0 : i32
    %c0_i32_0 = arith.constant 0 : i32
    return %c0_i32, %arg1 : i32, i32
  }
  func.func @transform_2(%arg0: i32, %arg1: i32) -> (i32, i32) {
    %c0_i32 = arith.constant 0 : i32
    %c0_i32_0 = arith.constant 0 : i32
    return %c0_i32, %arg1 : i32, i32
  }
  func.func @transform_3(%arg0: i32, %arg1: i32) -> (i32, i32) {
    %c0_i32 = arith.constant 0 : i32
    return %arg0, %arg1 : i32, i32
  }
}

</mosaic_0001>

<llo_original>
// kernel: encoder_forward.1
$region0: #{encoder_forward.1}
  #allocation0 [shape = 'u32[]', space=smem, size = 0x4, offset = 0x4, fixed_abs, tag = 'smem constant byte address 0x4 - core index']
  #allocation1 [shape = 'u32[144,128]{1,0:T(1,128)}', space=vmem, size = 0x12000, scoped, tag = 'internal scratch']
  %s0 = inlined_call_operand.hbm [shape: f32[8,128], index: 0, kind: input, shape index: {}]
  %s1 = inlined_call_operand.hbm [shape: f32[128,128], index: 1, kind: input, shape index: {}]
  %s2 = inlined_call_operand.vmem [shape: f32[1,128], index: 2, kind: input, shape index: {}]
  %s3 = inlined_call_operand.hbm [shape: f32[8,128], index: 3, kind: output, shape index: {}]
  %s4 = sld [smem:[#allocation0]]
  $region30: #{encoder_forward.1} parent=0
    _
  %s6 = ssub.s32 1, %s4
  %s7 = scalar_select 0, %s6, %s4
  $region1: #{encoder_forward.1} parent=0
    #allocation2 [shape = 'u8[4096]{0}', space=vmem, size = 0x1000, scoped, tag = 'input window, operand 0, single buffered']
    #allocation3 [shape = 's32[1]{0}', space=sflag, size = 0x4, scoped, tag = 'scoped memory for encoder_forward.1']
    #allocation4 [shape = 's32[1]{0}', space=sflag, size = 0x4, scoped, tag = 'scoped memory for encoder_forward.1']
    #allocation5 [shape = 'u8[65536]{0}', space=vmem, size = 0x10000, scoped, tag = 'input window, operand 1, single buffered']
    #allocation6 [shape = 's32[1]{0}', space=sflag, size = 0x4, scoped, tag = 'scoped memory for encoder_forward.1']
    #allocation7 [shape = 'u8[4096]{0}', space=vmem, size = 0x1000, scoped, tag = 'output window, operand 0, single buffered']
    %8 = vsyncpa [#allocation3], 0
    %9 = vsyncpa [#allocation6], 0
    %10 = vsyncpa [#allocation4], 0
    // Predicated region
    $region2: #{encoder_forward.1} parent=1 // pred_check
      _
    $region3: #{encoder_forward.1} parent=1 // pred_check_branch
      %12 = sbr.rel (0) target = $region5
    $region4: #{encoder_forward.1} parent=1 // pred_region
      %s14 = ssub.s32 128, 128
      %15 = vsyncadd [#allocation3], %s14
      %s17 = sshll.u32 [#allocation2], 4
      %s18 = int_to_ptr.vmem [resolvable:$true] %s17
      %20 = dma.hbm_to_vmem [thread:$0]  %s0, 128, %s18, [#allocation3]
    $region5: #{encoder_forward.1} parent=1 // pred_fallthru
      _
    // Predicated region
    $region6: #{encoder_forward.1} parent=1 // pred_check
      _
    $region7: #{encoder_forward.1} parent=1 // pred_check_branch
      %22 = sbr.rel (0) target = $region9
    $region8: #{encoder_forward.1} parent=1 // pred_region
      %s24 = ssub.s32 2048, 2048
      %25 = vsyncadd [#allocation6], %s24
      %s26 = sshll.u32 [#allocation5], 4
      %s27 = int_to_ptr.vmem [resolvable:$true] %s26
      %32 = dma.hbm_to_vmem [thread:$0]  %s1, 2048, %s27, [#allocation6], 128, 128, 8
    $region9: #{encoder_forward.1} parent=1 // pred_fallthru
      _
    // Predicated region
    $region10: #{encoder_forward.1} parent=1 // pred_check
      _
    $region11: #{encoder_forward.1} parent=1 // pred_check_branch
      %34 = sbr.rel (0) target = $region13
    $region12: #{encoder_forward.1} parent=1 // pred_region
      _
    $region13: #{encoder_forward.1} parent=1 // pred_fallthru
      _
    // Predicated region
    $region14: #{encoder_forward.1} parent=1 // pred_check
      _
    $region15: #{encoder_forward.1} parent=1 // pred_check_branch
      %36 = sbr.rel (0) target = $region17
    $region16: #{encoder_forward.1} parent=1 // pred_region
      %37 = dma.done [#allocation3], 128
    $region17: #{encoder_forward.1} parent=1 // pred_fallthru
      _
    // Predicated region
    $region18: #{encoder_forward.1} parent=1 // pred_check
      _
    $region19: #{encoder_forward.1} parent=1 // pred_check_branch
      %39 = sbr.rel (0) target = $region21
    $region20: #{encoder_forward.1} parent=1 // pred_region
      %40 = dma.done [#allocation6], 2048
    $region21: #{encoder_forward.1} parent=1 // pred_fallthru
      _
    %v41 = vld [vmem:[#allocation2] sm:$0xff]
    %v42 = vld [vmem:[#allocation5] sm:$0xff]
    %v43 = vld [vmem:[#allocation5 + $0x8] sm:$0xff]
    %v44 = vld [vmem:[#allocation5 + $0x10] sm:$0xff]
    %v45 = vld [vmem:[#allocation5 + $0x18] sm:$0xff]
    %v46 = vld [vmem:[#allocation5 + $0x20] sm:$0xff]
    %v47 = vld [vmem:[#allocation5 + $0x28] sm:$0xff]
    %v48 = vld [vmem:[#allocation5 + $0x30] sm:$0xff]
    %v49 = vld [vmem:[#allocation5 + $0x38] sm:$0xff]
    %v50 = vld [vmem:[#allocation5 + $0x40] sm:$0xff]
    %v51 = vld [vmem:[#allocation5 + $0x48] sm:$0xff]
    %v52 = vld [vmem:[#allocation5 + $0x50] sm:$0xff]
    %v53 = vld [vmem:[#allocation5 + $0x58] sm:$0xff]
    %v54 = vld [vmem:[#allocation5 + $0x60] sm:$0xff]
    %v55 = vld [vmem:[#allocation5 + $0x68] sm:$0xff]
    %v56 = vld [vmem:[#allocation5 + $0x70] sm:$0xff]
    %v57 = vld [vmem:[#allocation5 + $0x78] sm:$0xff]
    %v58 = vld [vmem:[%s2] sm:$0x1]
    %v60 = vlaneseq
    %v61 = vshrl.u32 %v60, 7
    %v62 = vsub.s32 0, %v61
    %v63 = vrot.slane %v58, %v62
    %65 = vmatprep.subr.mxu0 0.0
    %66 = vmatpush1.msra.mxu0 %v42
    %67 = vmatprep.subr.mxu0 0.0
    %68 = vmatpush1.msra.mxu0 %v43
    %69 = vmatprep.subr.mxu0 0.0
    %70 = vmatpush1.msra.mxu0 %v44
    %71 = vmatprep.subr.mxu0 0.0
    %72 = vmatpush1.msra.mxu0 %v45
    %73 = vmatprep.subr.mxu0 0.0
    %74 = vmatpush1.msra.mxu0 %v46
    %75 = vmatprep.subr.mxu0 0.0
    %76 = vmatpush1.msra.mxu0 %v47
    %77 = vmatprep.subr.mxu0 0.0
    %78 = vmatpush1.msra.mxu0 %v48
    %79 = vmatprep.subr.mxu0 0.0
    %80 = vmatpush1.msra.mxu0 %v49
    %81 = vmatprep.subr.mxu0 0.0
    %82 = vmatpush1.msra.mxu0 %v50
    %83 = vmatprep.subr.mxu0 0.0
    %84 = vmatpush1.msra.mxu0 %v51
    %85 = vmatprep.subr.mxu0 0.0
    %86 = vmatpush1.msra.mxu0 %v52
    %87 = vmatprep.subr.mxu0 0.0
    %88 = vmatpush1.msra.mxu0 %v53
    %89 = vmatprep.subr.mxu0 0.0
    %90 = vmatpush1.msra.mxu0 %v54
    %91 = vmatprep.subr.mxu0 0.0
    %92 = vmatpush1.msra.mxu0 %v55
    %93 = vmatprep.subr.mxu0 0.0
    %94 = vmatpush1.msra.mxu0 %v56
    %95 = vmatprep.subr.mxu0 0.0
    %96 = vmatpush1.msra.mxu0 %v57
    %97 = vmatprep.subr.mxu0 0.0
    %98 = vmatpush1.msra.mxu0 0.0
    %99 = vmatprep.subr.mxu0 0.0
    %100 = vmatpush1.msra.mxu0 0.0
    %101 = vmatprep.subr.mxu0 0.0
    %102 = vmatpush1.msra.mxu0 0.0
    %103 = vmatprep.subr.mxu0 0.0
    %104 = vmatpush1.msra.mxu0 0.0
    %105 = vmatprep.subr.mxu0 0.0
    %106 = vmatpush1.msra.mxu0 0.0
    %107 = vmatprep.subr.mxu0 0.0
    %108 = vmatpush1.msra.mxu0 0.0
    %109 = vmatprep.subr.mxu0 0.0
    %110 = vmatpush1.msra.mxu0 0.0
    %111 = vmatprep.subr.mxu0 0.0
    %112 = vmatpush1.msra.mxu0 0.0
    %113 = vmatprep.subr.mxu0 0.0
    %114 = vmatpush1.msra.mxu0 0.0
    %115 = vmatprep.subr.mxu0 0.0
    %116 = vmatpush1.msra.mxu0 0.0
    %117 = vmatprep.subr.mxu0 0.0
    %118 = vmatpush1.msra.mxu0 0.0
    %119 = vmatprep.subr.mxu0 0.0
    %120 = vmatpush1.msra.mxu0 0.0
    %121 = vmatprep.subr.mxu0 0.0
    %122 = vmatpush1.msra.mxu0 0.0
    %123 = vmatprep.subr.mxu0 0.0
    %124 = vmatpush1.msra.mxu0 0.0
    %125 = vmatprep.subr.mxu0 0.0
    %126 = vmatpush1.msra.mxu0 0.0
    %127 = vmatprep.subr.mxu0 0.0
    %128 = vmatpush1.msra.mxu0 0.0
    %129 = vmatprep.mubr.f32.mxu0 0.0
    %130 = vmatmul.mubr.f32.gmra.mrb[0].mxu0 %v41
    %v131 = vpop.f32.mrb[0].mxu0
    %v132 = vadd.f32 %v63, %v131
    %v133 = vpop.f32.mrb[0].mxu0
    %134 = vdwg.mxu0
    %135 = vst [vmem:[#allocation7] sm:$0xff] %v132
    // Predicated region
    $region22: #{encoder_forward.1} parent=1 // pred_check
      _
    $region23: #{encoder_forward.1} parent=1 // pred_check_branch
      %137 = sbr.rel (0) target = $region25
    $region24: #{encoder_forward.1} parent=1 // pred_region
      %s139 = ssub.s32 128, 128
      %140 = vsyncadd [#allocation4], %s139
      %s142 = sshll.u32 [#allocation7], 4
      %s143 = int_to_ptr.vmem [resolvable:$true] %s142
      %145 = dma.vmem_to_hbm [thread:$0]  %s143, 128, %s3, [#allocation4]
    $region25: #{encoder_forward.1} parent=1 // pred_fallthru
      _
    // Predicated region
    $region26: #{encoder_forward.1} parent=1 // pred_check
      _
    $region27: #{encoder_forward.1} parent=1 // pred_check_branch
      %147 = sbr.rel (0) target = $region29
    $region28: #{encoder_forward.1} parent=1 // pred_region
      %148 = dma.done [#allocation4], 128
    $region29: #{encoder_forward.1} parent=1 // pred_fallthru
      _
    %149 = vsyncpa [#allocation3], 1
    %150 = vsyncpa [#allocation6], 1
    %151 = vsyncpa [#allocation4], 1

</llo_original>
